<compile_context>
chip_gen: v7x
topology: tpu7x:2x2x1
jax: 0.10.0
libtpu: 0.0.40
codegen_flags: <defaults>
</compile_context>

<pallas_src>
import math

import numpy as np
import jax
import jax.numpy as jnp
from jax.experimental import pallas as pl
from jax.experimental.pallas import tpu as pltpu


# ----------------------------------------------------------------------------
# Clifford algebra Cl(3,0) tables (synthetic, built in-script)
# ----------------------------------------------------------------------------
def build_cl3_algebra():
    """Cayley table cayley[i, j, k]: coefficient of blade j in (blade_i * blade_k)."""
    n = 3
    blades = sorted(range(2 ** n), key=lambda b: (bin(b).count("1"), b))
    index = {b: i for i, b in enumerate(blades)}
    dim = len(blades)                       # 8
    cayley = np.zeros((dim, dim, dim), dtype=np.float32)
    for a in blades:
        for b in blades:
            swaps = 0
            for bit in range(n):
                if (b >> bit) & 1:
                    swaps += bin(a >> (bit + 1)).count("1")
            sign = -1.0 if (swaps % 2) else 1.0
            cayley[index[a], index[a ^ b], index[b]] += sign
    subspaces = np.array([1, 3, 3, 1], dtype=np.int32)   # grades 0..3
    return cayley, subspaces


# ----------------------------------------------------------------------------
# Pallas kernel: pairwise geometric product + attention-score MLP
# (pairs p = m*S + n stay on lanes throughout; everything is plain matmuls
#  plus one elementwise multiply -- no relayout / row-slice assembly)
# ----------------------------------------------------------------------------
def _gp_attention_kernel(qt_ref, kt_ref, eq_ref, ek_ref, rq_ref, rk_ref, cf_ref,
                         w1_ref, b1_ref, w2_ref, b2_ref, w3_ref, b3_ref, o_ref):
    # qt/kt : (1, D, S) bf16   q/k transposed (blade index on sublanes)
    # eq/ek : (S, P)    bf16   0/1 pair-expansion selectors, P = S*S
    # rq/rk : (D*D, D)  bf16   0/1 (i,k)-grid expansion selectors
    # cf    : (D, D*D)  bf16   flattened cayley: cf[j, i*D+k] = C[i,j,k]
    # w1/w2/w3 : (H,D)/(H,H)/(1,H) bf16 transposed MLP weights
    # b1/b2/b3 : (H,1)/(H,1)/(1,1) f32 bias columns
    # o_ref : (1, 1, P) f32    lane-dense attention-score row
    qt = qt_ref[0]                                                         # (D, S)
    kt = kt_ref[0]                                                         # (D, S)

    # All-pairs expansion (pairs on lanes):
    #   q_exp[i, m*S+n] = q[m, i],   k_exp[k, m*S+n] = k[n, k]
    q_exp = jnp.dot(qt, eq_ref[...], preferred_element_type=jnp.float32)   # (D, P)
    k_exp = jnp.dot(kt, ek_ref[...], preferred_element_type=jnp.float32)   # (D, P)

    # Expand onto the (i, k) product grid (rows ordered i*D + k).
    q_rep = jnp.dot(rq_ref[...], q_exp.astype(jnp.bfloat16),
                    preferred_element_type=jnp.float32)                    # (D*D, P)
    k_til = jnp.dot(rk_ref[...], k_exp.astype(jnp.bfloat16),
                    preferred_element_type=jnp.float32)                    # (D*D, P)

    # Geometric product as a single matmul:
    #   g[j, p] = sum_{i,k} C[i,j,k] * q[m,i] * k[n,k],   p = m*S + n
    qk = (q_rep * k_til).astype(jnp.bfloat16)                              # (D*D, P)
    g = jnp.dot(cf_ref[...], qk, preferred_element_type=jnp.float32)       # (D, P)

    # att_prj MLP, transposed so every activation stays lane-dense (rows, P):
    #   Linear(D,H) -> ReLU -> Linear(H,H) -> ReLU -> Linear(H,1)
    h = jnp.dot(w1_ref[...], g.astype(jnp.bfloat16),
                preferred_element_type=jnp.float32) + b1_ref[...]          # (H, P)
    h = jnp.maximum(h, 0.0)
    h = jnp.dot(w2_ref[...], h.astype(jnp.bfloat16),
                preferred_element_type=jnp.float32) + b2_ref[...]          # (H, P)
    h = jnp.maximum(h, 0.0)
    out = jnp.dot(w3_ref[...], h.astype(jnp.bfloat16),
                  preferred_element_type=jnp.float32) + b3_ref[...]        # (1, P)

    o_ref[0] = out                                                         # lane-dense store


# ----------------------------------------------------------------------------
# Plain-JAX glue: MVLinear, LayerNorm, wrapper
# ----------------------------------------------------------------------------
def mv_linear(x, weight, bias, subspaces):
    """MVLinear with subspaces=True: einsum('bmi,nmi->bni') with per-blade weights."""
    idx = np.repeat(np.arange(len(subspaces)), subspaces)     # (D,)
    w_full = weight[:, :, idx]                                # (S_out, S_in, D)
    out = jnp.einsum("bmi,nmi->bni", x, w_full)
    # algebra.embed(bias, (0,)): bias lives only in the scalar blade (index 0)
    bias_mv = jnp.zeros((1, weight.shape[0], w_full.shape[-1]), x.dtype)
    bias_mv = bias_mv.at[..., 0].set(bias[..., 0])
    return out + bias_mv


def layer_norm(x, gamma, beta, eps=1e-5):
    mu = jnp.mean(x, axis=-1, keepdims=True)
    var = jnp.mean(jnp.square(x - mu), axis=-1, keepdims=True)
    return (x - mu) * jax.lax.rsqrt(var + eps) * gamma + beta


def geometric_product_attention(x, params, cayley, subspaces):
    B, S, D = x.shape
    H = params["w1"].shape[1]
    P = S * S
    DD = D * D

    # q/k projections along the sequence axis + shared LayerNorm (as in the ref).
    q = layer_norm(mv_linear(x, params["wq"], params["bq"], subspaces),
                   params["ln_g"], params["ln_b"])
    k = layer_norm(mv_linear(x, params["wk"], params["bk"], subspaces),
                   params["ln_g"], params["ln_b"])

    # bf16 operands + fp32 accumulation inside the kernel stand in for the
    # reference's .half()/autocast (halves DMA bytes, native MXU input dtype).
    qt = jnp.transpose(q, (0, 2, 1)).astype(jnp.bfloat16)     # (B, D, S)
    kt = jnp.transpose(k, (0, 2, 1)).astype(jnp.bfloat16)     # (B, D, S)

    # Constant tables: 0/1 selectors for the pair / (i,k)-grid expansions and
    # the flattened cayley table (all tiny, kept resident across grid steps).
    eye_s = np.eye(S, dtype=np.float32)
    eye_d = np.eye(D, dtype=np.float32)
    eq = jnp.asarray(np.kron(eye_s, np.ones((1, S), np.float32)), jnp.bfloat16)  # (S, P)
    ek = jnp.asarray(np.tile(eye_s, (1, S)), jnp.bfloat16)                        # (S, P)
    rq = jnp.asarray(np.kron(eye_d, np.ones((D, 1), np.float32)), jnp.bfloat16)  # (DD, D)
    rk = jnp.asarray(np.tile(eye_d, (D, 1)), jnp.bfloat16)                        # (DD, D)
    cf = jnp.transpose(cayley, (1, 0, 2)).reshape(D, DD).astype(jnp.bfloat16)     # (D, DD)

    # Transposed MLP parameters (kernel activations are (rows, pairs)).
    w1t = jnp.transpose(params["w1"]).astype(jnp.bfloat16)    # (H, D)
    w2t = jnp.transpose(params["w2"]).astype(jnp.bfloat16)    # (H, H)
    w3t = jnp.transpose(params["w3"]).astype(jnp.bfloat16)    # (1, H)
    b1c = params["b1"].reshape(H, 1)
    b2c = params["b2"].reshape(H, 1)
    b3c = params["b3"].reshape(1, 1)

    # TODO(synk): for large S, add a grid axis tiling the pair axis so the
    # (H, P) MLP activations stay within VMEM (v7x: 64 MiB physical).
    out = pl.pallas_call(
        _gp_attention_kernel,
        out_shape=jax.ShapeDtypeStruct((B, 1, P), jnp.float32),
        grid=(B,),
        in_specs=[
            pl.BlockSpec((1, D, S), lambda b: (b, 0, 0)),     # q (transposed)
            pl.BlockSpec((1, D, S), lambda b: (b, 0, 0)),     # k (transposed)
            pl.BlockSpec((S, P), lambda b: (0, 0)),           # eq
            pl.BlockSpec((S, P), lambda b: (0, 0)),           # ek
            pl.BlockSpec((DD, D), lambda b: (0, 0)),          # rq
            pl.BlockSpec((DD, D), lambda b: (0, 0)),          # rk
            pl.BlockSpec((D, DD), lambda b: (0, 0)),          # cayley (flattened)
            pl.BlockSpec((H, D), lambda b: (0, 0)),           # w1^T
            pl.BlockSpec((H, 1), lambda b: (0, 0)),           # b1
            pl.BlockSpec((H, H), lambda b: (0, 0)),           # w2^T
            pl.BlockSpec((H, 1), lambda b: (0, 0)),           # b2
            pl.BlockSpec((1, H), lambda b: (0, 0)),           # w3^T
            pl.BlockSpec((1, 1), lambda b: (0, 0)),           # b3
        ],
        out_specs=pl.BlockSpec((1, 1, P), lambda b: (b, 0, 0)),
        compiler_params=pltpu.CompilerParams(dimension_semantics=("parallel",)),
    )(qt, kt, eq, ek, rq, rk, cf, w1t, b1c, w2t, b2c, w3t, b3c)

    # TODO(synk): nn.Dropout(p=0.5) is stochastic in training mode; treated as
    # identity here (eval/inference semantics).
    return out.reshape(B, S, S, 1)


# ----------------------------------------------------------------------------
# main
# ----------------------------------------------------------------------------
if __name__ == "__main__":
    cayley_np, subspaces = build_cl3_algebra()

    B = 2                      # batch
    S = 8                      # seq_length (== MVLinear in/out features)
    D = cayley_np.shape[0]     # embed_dim == multivector dim == 8
    H = 32                     # hidden_dim of att_prj
    NSUB = len(subspaces)      # 4

    key = jax.random.PRNGKey(0)
    ks = jax.random.split(key, 6)

    x = jax.random.normal(ks[0], (B, S, D), jnp.float32)

    params = {
        # MVLinear q/k: weight (out, in, n_subspaces), std = 1/sqrt(in_features)
        "wq": jax.random.normal(ks[1], (S, S, NSUB), jnp.float32) / math.sqrt(S),
        "bq": jnp.zeros((1, S, 1), jnp.float32),
        "wk": jax.random.normal(ks[2], (S, S, NSUB), jnp.float32) / math.sqrt(S),
        "bk": jnp.zeros((1, S, 1), jnp.float32),
        # shared LayerNorm(embed_dim)
        "ln_g": jnp.ones((D,), jnp.float32),
        "ln_b": jnp.zeros((D,), jnp.float32),
        # att_prj MLP: Linear(D,H) -> ReLU -> Linear(H,H) -> ReLU -> Linear(H,1)
        "w1": jax.random.normal(ks[3], (D, H), jnp.float32) / math.sqrt(D),
        "b1": jnp.zeros((1, H), jnp.float32),
        "w2": jax.random.normal(ks[4], (H, H), jnp.float32) / math.sqrt(H),
        "b2": jnp.zeros((1, H), jnp.float32),
        "w3": jax.random.normal(ks[5], (H, 1), jnp.float32) / math.sqrt(H),
        "b3": jnp.zeros((1, 1), jnp.float32),
    }

    cayley = jnp.asarray(cayley_np)

    out = geometric_product_attention(x, params, cayley, subspaces)
    out = jax.block_until_ready(out)

    assert out.shape == (B, S, S, 1), out.shape
    assert bool(jnp.all(jnp.isfinite(out)))

    # Pure-JAX reference using the same bf16-rounded operands (the kernel
    # additionally rounds a few intermediates to bf16 for the MXU, hence the
    # loose tolerance).
    q_ref = layer_norm(mv_linear(x, params["wq"], params["bq"], subspaces),
                       params["ln_g"], params["ln_b"])
    k_ref = layer_norm(mv_linear(x, params["wk"], params["bk"], subspaces),
                       params["ln_g"], params["ln_b"])
    qb = q_ref.astype(jnp.bfloat16).astype(jnp.float32)
    kb = k_ref.astype(jnp.bfloat16).astype(jnp.float32)
    cb = cayley.astype(jnp.bfloat16).astype(jnp.float32)
    g_ref = jnp.einsum("bmi,ijk,bnk->bmnj", qb, cb, kb)
    w1 = params["w1"].astype(jnp.bfloat16).astype(jnp.float32)
    w2 = params["w2"].astype(jnp.bfloat16).astype(jnp.float32)
    w3 = params["w3"].astype(jnp.bfloat16).astype(jnp.float32)
    hr = jnp.maximum(jnp.einsum("bmnj,jh->bmnh", g_ref, w1) + params["b1"][0], 0.0)
    hr = jnp.maximum(jnp.einsum("bmnh,hg->bmng", hr, w2) + params["b2"][0], 0.0)
    ref = jnp.einsum("bmnh,ho->bmno", hr, w3) + params["b3"][0]
    assert bool(jnp.allclose(out, ref, atol=0.15, rtol=0.1)), \
        float(jnp.max(jnp.abs(out - ref)))

    print("KERNEL_OK")
</pallas_src>

<mosaic_0001>
module attributes {stable_mosaic.version = 11 : i64} {
  func.func @_gp_attention_kernel(%arg0: i32, %arg1: memref<1x8x8xbf16, #tpu.memory_space<vmem>>, %arg2: memref<1x8x8xbf16, #tpu.memory_space<vmem>>, %arg3: memref<8x64xbf16, #tpu.memory_space<vmem>>, %arg4: memref<8x64xbf16, #tpu.memory_space<vmem>>, %arg5: memref<64x8xbf16, #tpu.memory_space<vmem>>, %arg6: memref<64x8xbf16, #tpu.memory_space<vmem>>, %arg7: memref<8x64xbf16, #tpu.memory_space<vmem>>, %arg8: memref<32x8xbf16, #tpu.memory_space<vmem>>, %arg9: memref<32x1xf32, #tpu.memory_space<vmem>>, %arg10: memref<32x32xbf16, #tpu.memory_space<vmem>>, %arg11: memref<32x1xf32, #tpu.memory_space<vmem>>, %arg12: memref<1x32xbf16, #tpu.memory_space<vmem>>, %arg13: memref<1x1xf32, #tpu.memory_space<vmem>>, %arg14: memref<1x1x64xf32, #tpu.memory_space<vmem>>) attributes {dimension_semantics = [#tpu.dimension_semantics<parallel>], iteration_bounds = array<i64: 2>, scalar_prefetch = 0 : i64, scratch_operands = 0 : i64, tpu.core_type = #tpu.core_type<tc>, window_params = [{transform_indices = @transform_0, window_bounds = array<i64: 1, 8, 8>}, {transform_indices = @transform_1, window_bounds = array<i64: 1, 8, 8>}, {pipeline_mode = #tpu.pipeline_mode<synchronous>, transform_indices = @transform_2, window_bounds = array<i64: 8, 64>}, {pipeline_mode = #tpu.pipeline_mode<synchronous>, transform_indices = @transform_3, window_bounds = array<i64: 8, 64>}, {pipeline_mode = #tpu.pipeline_mode<synchronous>, transform_indices = @transform_4, window_bounds = array<i64: 64, 8>}, {pipeline_mode = #tpu.pipeline_mode<synchronous>, transform_indices = @transform_5, window_bounds = array<i64: 64, 8>}, {pipeline_mode = #tpu.pipeline_mode<synchronous>, transform_indices = @transform_6, window_bounds = array<i64: 8, 64>}, {pipeline_mode = #tpu.pipeline_mode<synchronous>, transform_indices = @transform_7, window_bounds = array<i64: 32, 8>}, {pipeline_mode = #tpu.pipeline_mode<synchronous>, transform_indices = @transform_8, window_bounds = array<i64: 32, 1>}, {pipeline_mode = #tpu.pipeline_mode<synchronous>, transform_indices = @transform_9, window_bounds = array<i64: 32, 32>}, {pipeline_mode = #tpu.pipeline_mode<synchronous>, transform_indices = @transform_10, window_bounds = array<i64: 32, 1>}, {pipeline_mode = #tpu.pipeline_mode<synchronous>, transform_indices = @transform_11, window_bounds = array<i64: 1, 32>}, {pipeline_mode = #tpu.pipeline_mode<synchronous>, transform_indices = @transform_12, window_bounds = array<i64: 1, 1>}, {transform_indices = @transform_13, window_bounds = array<i64: 1, 1, 64>}]} {
    %c0 = arith.constant 0 : index
    %c0_0 = arith.constant 0 : index
    %c0_1 = arith.constant 0 : index
    %0 = vector.load %arg1[%c0, %c0_0, %c0_1] : memref<1x8x8xbf16, #tpu.memory_space<vmem>>, vector<1x8x8xbf16>
    %1 = vector.shape_cast %0 : vector<1x8x8xbf16> to vector<8x8xbf16>
    %c0_2 = arith.constant 0 : index
    %c0_3 = arith.constant 0 : index
    %c0_4 = arith.constant 0 : index
    %2 = vector.load %arg2[%c0_2, %c0_3, %c0_4] : memref<1x8x8xbf16, #tpu.memory_space<vmem>>, vector<1x8x8xbf16>
    %3 = vector.shape_cast %2 : vector<1x8x8xbf16> to vector<8x8xbf16>
    %c0_5 = arith.constant 0 : index
    %c0_6 = arith.constant 0 : index
    %4 = vector.load %arg3[%c0_5, %c0_6] : memref<8x64xbf16, #tpu.memory_space<vmem>>, vector<8x64xbf16>
    %cst = arith.constant dense<0.000000e+00> : vector<8x64xf32>
    %5 = tpu.matmul %1, %4, %cst {dimension_numbers = #tpu.dot_dimension_numbers<[1], [0], [0], [1], [0, 0, 1, 1], [], []>} : vector<8x8xbf16>, vector<8x64xbf16>, vector<8x64xf32> -> vector<8x64xf32>
    %c0_7 = arith.constant 0 : index
    %c0_8 = arith.constant 0 : index
    %6 = vector.load %arg4[%c0_7, %c0_8] : memref<8x64xbf16, #tpu.memory_space<vmem>>, vector<8x64xbf16>
    %cst_9 = arith.constant dense<0.000000e+00> : vector<8x64xf32>
    %7 = tpu.matmul %3, %6, %cst_9 {dimension_numbers = #tpu.dot_dimension_numbers<[1], [0], [0], [1], [0, 0, 1, 1], [], []>} : vector<8x8xbf16>, vector<8x64xbf16>, vector<8x64xf32> -> vector<8x64xf32>
    %c0_10 = arith.constant 0 : index
    %c0_11 = arith.constant 0 : index
    %8 = vector.load %arg5[%c0_10, %c0_11] : memref<64x8xbf16, #tpu.memory_space<vmem>>, vector<64x8xbf16>
    %9 = arith.truncf %5 : vector<8x64xf32> to vector<8x64xbf16>
    %cst_12 = arith.constant dense<0.000000e+00> : vector<64x64xf32>
    %10 = tpu.matmul %8, %9, %cst_12 {dimension_numbers = #tpu.dot_dimension_numbers<[1], [0], [0], [1], [0, 0, 1, 1], [], []>} : vector<64x8xbf16>, vector<8x64xbf16>, vector<64x64xf32> -> vector<64x64xf32>
    %c0_13 = arith.constant 0 : index
    %c0_14 = arith.constant 0 : index
    %11 = vector.load %arg6[%c0_13, %c0_14] : memref<64x8xbf16, #tpu.memory_space<vmem>>, vector<64x8xbf16>
    %12 = arith.truncf %7 : vector<8x64xf32> to vector<8x64xbf16>
    %cst_15 = arith.constant dense<0.000000e+00> : vector<64x64xf32>
    %13 = tpu.matmul %11, %12, %cst_15 {dimension_numbers = #tpu.dot_dimension_numbers<[1], [0], [0], [1], [0, 0, 1, 1], [], []>} : vector<64x8xbf16>, vector<8x64xbf16>, vector<64x64xf32> -> vector<64x64xf32>
    %14 = arith.mulf %10, %13 : vector<64x64xf32>
    %15 = arith.truncf %14 : vector<64x64xf32> to vector<64x64xbf16>
    %c0_16 = arith.constant 0 : index
    %c0_17 = arith.constant 0 : index
    %16 = vector.load %arg7[%c0_16, %c0_17] : memref<8x64xbf16, #tpu.memory_space<vmem>>, vector<8x64xbf16>
    %cst_18 = arith.constant dense<0.000000e+00> : vector<8x64xf32>
    %17 = tpu.matmul %16, %15, %cst_18 {dimension_numbers = #tpu.dot_dimension_numbers<[1], [0], [0], [1], [0, 0, 1, 1], [], []>} : vector<8x64xbf16>, vector<64x64xbf16>, vector<8x64xf32> -> vector<8x64xf32>
    %c0_19 = arith.constant 0 : index
    %c0_20 = arith.constant 0 : index
    %18 = vector.load %arg8[%c0_19, %c0_20] : memref<32x8xbf16, #tpu.memory_space<vmem>>, vector<32x8xbf16>
    %19 = arith.truncf %17 : vector<8x64xf32> to vector<8x64xbf16>
    %cst_21 = arith.constant dense<0.000000e+00> : vector<32x64xf32>
    %20 = tpu.matmul %18, %19, %cst_21 {dimension_numbers = #tpu.dot_dimension_numbers<[1], [0], [0], [1], [0, 0, 1, 1], [], []>} : vector<32x8xbf16>, vector<8x64xbf16>, vector<32x64xf32> -> vector<32x64xf32>
    %c0_22 = arith.constant 0 : index
    %c0_23 = arith.constant 0 : index
    %21 = vector.load %arg9[%c0_22, %c0_23] : memref<32x1xf32, #tpu.memory_space<vmem>>, vector<32x1xf32>
    %22 = vector.broadcast %21 : vector<32x1xf32> to vector<32x64xf32>
    %23 = arith.addf %20, %22 : vector<32x64xf32>
    %cst_24 = arith.constant 0.000000e+00 : f32
    %24 = vector.broadcast %cst_24 : f32 to vector<32x64xf32>
    %25 = arith.maximumf %23, %24 : vector<32x64xf32>
    %c0_25 = arith.constant 0 : index
    %c0_26 = arith.constant 0 : index
    %26 = vector.load %arg10[%c0_25, %c0_26] : memref<32x32xbf16, #tpu.memory_space<vmem>>, vector<32x32xbf16>
    %27 = arith.truncf %25 : vector<32x64xf32> to vector<32x64xbf16>
    %cst_27 = arith.constant dense<0.000000e+00> : vector<32x64xf32>
    %28 = tpu.matmul %26, %27, %cst_27 {dimension_numbers = #tpu.dot_dimension_numbers<[1], [0], [0], [1], [0, 0, 1, 1], [], []>} : vector<32x32xbf16>, vector<32x64xbf16>, vector<32x64xf32> -> vector<32x64xf32>
    %c0_28 = arith.constant 0 : index
    %c0_29 = arith.constant 0 : index
    %29 = vector.load %arg11[%c0_28, %c0_29] : memref<32x1xf32, #tpu.memory_space<vmem>>, vector<32x1xf32>
    %30 = vector.broadcast %29 : vector<32x1xf32> to vector<32x64xf32>
    %31 = arith.addf %28, %30 : vector<32x64xf32>
    %cst_30 = arith.constant 0.000000e+00 : f32
    %32 = vector.broadcast %cst_30 : f32 to vector<32x64xf32>
    %33 = arith.maximumf %31, %32 : vector<32x64xf32>
    %c0_31 = arith.constant 0 : index
    %c0_32 = arith.constant 0 : index
    %34 = vector.load %arg12[%c0_31, %c0_32] : memref<1x32xbf16, #tpu.memory_space<vmem>>, vector<1x32xbf16>
    %35 = arith.truncf %33 : vector<32x64xf32> to vector<32x64xbf16>
    %cst_33 = arith.constant dense<0.000000e+00> : vector<1x64xf32>
    %36 = tpu.matmul %34, %35, %cst_33 {dimension_numbers = #tpu.dot_dimension_numbers<[1], [0], [0], [1], [0, 0, 1, 1], [], []>} : vector<1x32xbf16>, vector<32x64xbf16>, vector<1x64xf32> -> vector<1x64xf32>
    %c0_34 = arith.constant 0 : index
    %c0_35 = arith.constant 0 : index
    %37 = vector.load %arg13[%c0_34, %c0_35] : memref<1x1xf32, #tpu.memory_space<vmem>>, vector<1x1xf32>
    %38 = vector.broadcast %37 : vector<1x1xf32> to vector<1x64xf32>
    %39 = arith.addf %36, %38 : vector<1x64xf32>
    %c0_36 = arith.constant 0 : index
    %c0_37 = arith.constant 0 : index
    %c0_38 = arith.constant 0 : index
    %40 = vector.load %arg14[%c0_36, %c0_37, %c0_38] : memref<1x1x64xf32, #tpu.memory_space<vmem>>, vector<1x1x64xf32>
    %41 = vector.shape_cast %40 : vector<1x1x64xf32> to vector<1x64xf32>
    %42 = vector.shape_cast %39 : vector<1x64xf32> to vector<1x1x64xf32>
    tpu.vector_store %arg14[%c0_36, %c0_37, %c0_38], %42 {strides = array<i32>} : memref<1x1x64xf32, #tpu.memory_space<vmem>>, vector<1x1x64xf32>,
    return
  }
  func.func @transform_0(%arg0: i32) -> (i32, i32, i32) {
    %c0_i32 = arith.constant 0 : i32
    %c0_i32_0 = arith.constant 0 : i32
    %c0_i32_1 = arith.constant 0 : i32
    return %arg0, %c0_i32, %c0_i32_0 : i32, i32, i32
  }
  func.func @transform_1(%arg0: i32) -> (i32, i32, i32) {
    %c0_i32 = arith.constant 0 : i32
    %c0_i32_0 = arith.constant 0 : i32
    %c0_i32_1 = arith.constant 0 : i32
    return %arg0, %c0_i32, %c0_i32_0 : i32, i32, i32
  }
  func.func @transform_2(%arg0: i32) -> (i32, i32) {
    %c0_i32 = arith.constant 0 : i32
    %c0_i32_0 = arith.constant 0 : i32
    %c0_i32_1 = arith.constant 0 : i32
    return %c0_i32, %c0_i32_0 : i32, i32
  }
  func.func @transform_3(%arg0: i32) -> (i32, i32) {
    %c0_i32 = arith.constant 0 : i32
    %c0_i32_0 = arith.constant 0 : i32
    %c0_i32_1 = arith.constant 0 : i32
    return %c0_i32, %c0_i32_0 : i32, i32
  }
  func.func @transform_4(%arg0: i32) -> (i32, i32) {
    %c0_i32 = arith.constant 0 : i32
    %c0_i32_0 = arith.constant 0 : i32
    %c0_i32_1 = arith.constant 0 : i32
    return %c0_i32, %c0_i32_0 : i32, i32
  }
  func.func @transform_5(%arg0: i32) -> (i32, i32) {
    %c0_i32 = arith.constant 0 : i32
    %c0_i32_0 = arith.constant 0 : i32
    %c0_i32_1 = arith.constant 0 : i32
    return %c0_i32, %c0_i32_0 : i32, i32
  }
  func.func @transform_6(%arg0: i32) -> (i32, i32) {
    %c0_i32 = arith.constant 0 : i32
    %c0_i32_0 = arith.constant 0 : i32
    %c0_i32_1 = arith.constant 0 : i32
    return %c0_i32, %c0_i32_0 : i32, i32
  }
  func.func @transform_7(%arg0: i32) -> (i32, i32) {
    %c0_i32 = arith.constant 0 : i32
    %c0_i32_0 = arith.constant 0 : i32
    %c0_i32_1 = arith.constant 0 : i32
    return %c0_i32, %c0_i32_0 : i32, i32
  }
  func.func @transform_8(%arg0: i32) -> (i32, i32) {
    %c0_i32 = arith.constant 0 : i32
    %c0_i32_0 = arith.constant 0 : i32
    %c0_i32_1 = arith.constant 0 : i32
    return %c0_i32, %c0_i32_0 : i32, i32
  }
  func.func @transform_9(%arg0: i32) -> (i32, i32) {
    %c0_i32 = arith.constant 0 : i32
    %c0_i32_0 = arith.constant 0 : i32
    %c0_i32_1 = arith.constant 0 : i32
    return %c0_i32, %c0_i32_0 : i32, i32
  }
  func.func @transform_10(%arg0: i32) -> (i32, i32) {
    %c0_i32 = arith.constant 0 : i32
    %c0_i32_0 = arith.constant 0 : i32
    %c0_i32_1 = arith.constant 0 : i32
    return %c0_i32, %c0_i32_0 : i32, i32
  }
  func.func @transform_11(%arg0: i32) -> (i32, i32) {
    %c0_i32 = arith.constant 0 : i32
    %c0_i32_0 = arith.constant 0 : i32
    %c0_i32_1 = arith.constant 0 : i32
    return %c0_i32, %c0_i32_0 : i32, i32
  }
  func.func @transform_12(%arg0: i32) -> (i32, i32) {
    %c0_i32 = arith.constant 0 : i32
    %c0_i32_0 = arith.constant 0 : i32
    %c0_i32_1 = arith.constant 0 : i32
    return %c0_i32, %c0_i32_0 : i32, i32
  }
  func.func @transform_13(%arg0: i32) -> (i32, i32, i32) {
    %c0_i32 = arith.constant 0 : i32
    %c0_i32_0 = arith.constant 0 : i32
    %c0_i32_1 = arith.constant 0 : i32
    return %arg0, %c0_i32, %c0_i32_0 : i32, i32, i32
  }
}

</mosaic_0001>

<llo_original>
// kernel: tpu_custom_call.1
$region0: #{tpu_custom_call.1}
  #allocation0 [shape = 'u32[]', space=smem, size = 0x4, offset = 0x4, fixed_abs, tag = 'smem constant byte address 0x4 - core index']
  #allocation1 [shape = 'u32[144,128]{1,0:T(1,128)}', space=vmem, size = 0x12000, scoped, tag = 'internal scratch']
  #allocation2 [shape = 'f32[1,1]{1,0:T(1,128)S(1)}', space=vmem, size = 0x200, scoped, tag = 'scoped memory for tpu_custom_call.1']
  %s0 = inlined_call_operand.vmem [shape: bf16[2,8,8], index: 0, kind: input, shape index: {}]
  %s1 = inlined_call_operand.vmem [shape: bf16[2,8,8], index: 1, kind: input, shape index: {}]
  %s2 = inlined_call_operand.vmem [shape: bf16[8,64], index: 2, kind: input, shape index: {}]
  %s3 = inlined_call_operand.vmem [shape: bf16[8,64], index: 3, kind: input, shape index: {}]
  %s4 = inlined_call_operand.vmem [shape: bf16[64,8], index: 4, kind: input, shape index: {}]
  %s5 = inlined_call_operand.vmem [shape: bf16[64,8], index: 5, kind: input, shape index: {}]
  %s6 = inlined_call_operand.vmem [shape: bf16[8,64], index: 6, kind: input, shape index: {}]
  %s7 = inlined_call_operand.vmem [shape: bf16[32,8], index: 7, kind: input, shape index: {}]
  %s8 = inlined_call_operand.vmem [shape: f32[32,1], index: 8, kind: input, shape index: {}]
  %s9 = inlined_call_operand.vmem [shape: bf16[32,32], index: 9, kind: input, shape index: {}]
  %s10 = inlined_call_operand.vmem [shape: f32[32,1], index: 10, kind: input, shape index: {}]
  %s11 = inlined_call_operand.vmem [shape: bf16[1,32], index: 11, kind: input, shape index: {}]
  %s12 = inlined_call_operand.<no memory space> [shape: f32[1,1], index: 12, kind: input, shape index: {}]
  %s13 = inlined_call_operand.hbm [shape: f32[2,1,64], index: 13, kind: output, shape index: {}]
  %s14 = sld [smem:[#allocation0]]
  $region85: #{tpu_custom_call.1} parent=0
    _
  %s16 = ssub.s32 1, %s14
  %s17 = scalar_select 0, %s16, %s14
  %v18 = vstv %s12
  %19 = vst [vmem:[#allocation2] sm:$0x1] %v18
  $region1: #{tpu_custom_call.1} parent=0
    #allocation3 [shape = 'u8[1024]{0}', space=vmem, size = 0x400, scoped, tag = 'output window, operand 0']
    #allocation4 [shape = 's32[2]{0}', space=sflag, size = 0x8, scoped, tag = 'scoped memory for tpu_custom_call.1']
    %20 = vsyncpa [#allocation4], 0
    %s21 = scalar_lea.sflag [#allocation4], 1
    %22 = vsyncpa %s21, 0
    loop: start=0, step=1, limit=4
    $region2: #{tpu_custom_call.1} parent=1 // loop_pre_header
      _
    $region3: #{tpu_custom_call.1} parent=1 // loop_header
      %s24 = sphi 0, %s28
      %p25 = scmp.ge.s32.totalorder %s24, 4
      %s34 = sphi 0, %s36
      %s37 = sphi 0, %s34
      %s38 = sphi 0, %s37
      %s54 = sphi 0, %s38
      %s60 = sphi 0, %s62
      %s63 = sphi 0, %s60
      %s64 = sphi 0, %s63
      %s80 = sphi 0, %s64
      %s84 = sphi 0, %s84
      %s86 = sphi 0, %s84
      %s87 = sphi 0, %s86
      %s101 = sphi 0, %s87
      %s105 = sphi 0, %s105
      %s107 = sphi 0, %s105
      %s108 = sphi 0, %s107
      %s122 = sphi 0, %s108
      %s126 = sphi 0, %s126
      %s128 = sphi 0, %s126
      %s129 = sphi 0, %s128
      %s143 = sphi 0, %s129
      %s147 = sphi 0, %s147
      %s149 = sphi 0, %s147
      %s150 = sphi 0, %s149
      %s164 = sphi 0, %s150
      %s168 = sphi 0, %s168
      %s170 = sphi 0, %s168
      %s171 = sphi 0, %s170
      %s185 = sphi 0, %s171
      %s189 = sphi 0, %s189
      %s191 = sphi 0, %s189
      %s192 = sphi 0, %s191
      %s206 = sphi 0, %s192
      %s210 = sphi 0, %s210
      %s212 = sphi 0, %s210
      %s213 = sphi 0, %s212
      %s227 = sphi 0, %s213
      %s231 = sphi 0, %s231
      %s233 = sphi 0, %s231
      %s234 = sphi 0, %s233
      %s248 = sphi 0, %s234
      %s252 = sphi 0, %s252
      %s254 = sphi 0, %s252
      %s255 = sphi 0, %s254
      %s269 = sphi 0, %s255
      %s273 = sphi 0, %s273
      %s275 = sphi 0, %s273
      %s276 = sphi 0, %s275
      %s290 = sphi 0, %s276
      %s294 = sphi 0, %s294
      %s296 = sphi 0, %s294
      %s297 = sphi 0, %s296
      %s311 = sphi 0, %s297
      %s317 = sphi 0, %s319
      %s320 = sphi 0, %s317
      %s321 = sphi 0, %s320
      %s337 = sphi 0, %s321
    $region4: #{tpu_custom_call.1} parent=1 // loop_header_branch
      %27 = sbr.rel (%p25) target = $region8
    $region5: #{tpu_custom_call.1} parent=1 // loop_body
      %s29 = ssub.s32 %s24, 1
      %s30 = ssub.s32 %s24, 2
      %s31 = sadd.s32 %s24, 1
      %s32 = ssub.s32 %s24, %s31
      %p33 = scmp.eq.s32.totalorder %s32, 0
      %s35 = sadd.s32 %s34, 1
      %s36 = scalar_select %p33, %s34, %s35
      %p39 = pneg %p33
      %p40 = scmp.eq.s32.totalorder %s24, 1
      %p41 = por %p39, %p40
      %p42 = scmp.ne.s32.totalorder %s34, %s37
      %p43 = scmp.eq.s32.totalorder %s24, 0
      %p44 = por %p42, %p43
      %p45 = scmp.ne.s32.totalorder %s34, %s37
      %p46 = scmp.eq.s32.totalorder %s29, 1
      %p47 = por %p45, %p46
      %p48 = scmp.ne.s32.totalorder %s37, %s38
      %p49 = scmp.eq.s32.totalorder %s29, 0
      %p50 = por %p48, %p49
      %p51 = scmp.ne.s32.totalorder %s37, %s38
      %p52 = scmp.eq.s32.totalorder %s30, 1
      %p53 = por %p51, %p52
      %p55 = scmp.ne.s32.totalorder %s38, %s54
      %p56 = scmp.eq.s32.totalorder %s30, 0
      %p57 = por %p55, %p56
      %s58 = ssub.s32 %s24, %s31
      %p59 = scmp.eq.s32.totalorder %s58, 0
      %s61 = sadd.s32 %s60, 1
      %s62 = scalar_select %p59, %s60, %s61
      %p65 = pneg %p59
      %p66 = scmp.eq.s32.totalorder %s24, 1
      %p67 = por %p65, %p66
      %p68 = scmp.ne.s32.totalorder %s60, %s63
      %p69 = scmp.eq.s32.totalorder %s24, 0
      %p70 = por %p68, %p69
      %p71 = scmp.ne.s32.totalorder %s60, %s63
      %p72 = scmp.eq.s32.totalorder %s29, 1
      %p73 = por %p71, %p72
      %p74 = scmp.ne.s32.totalorder %s63, %s64
      %p75 = scmp.eq.s32.totalorder %s29, 0
      %p76 = por %p74, %p75
      %p77 = scmp.ne.s32.totalorder %s63, %s64
      %p78 = scmp.eq.s32.totalorder %s30, 1
      %p79 = por %p77, %p78
      %p81 = scmp.ne.s32.totalorder %s64, %s80
      %p82 = scmp.eq.s32.totalorder %s30, 0
      %p83 = por %p81, %p82
      %s85 = sadd.s32 %s84, 1
      %p88 = scmp.eq.s32.totalorder %s24, 1
      %p89 = scmp.ne.s32.totalorder %s84, %s86
      %p90 = scmp.eq.s32.totalorder %s24, 0
      %p91 = por %p89, %p90
      %p92 = scmp.ne.s32.totalorder %s84, %s86
      %p93 = scmp.eq.s32.totalorder %s29, 1
      %p94 = por %p92, %p93
      %p95 = scmp.ne.s32.totalorder %s86, %s87
      %p96 = scmp.eq.s32.totalorder %s29, 0
      %p97 = por %p95, %p96
      %p98 = scmp.ne.s32.totalorder %s86, %s87
      %p99 = scmp.eq.s32.totalorder %s30, 1
      %p100 = por %p98, %p99
      %p102 = scmp.ne.s32.totalorder %s87, %s101
      %p103 = scmp.eq.s32.totalorder %s30, 0
      %p104 = por %p102, %p103
      %s106 = sadd.s32 %s105, 1
      %p109 = scmp.eq.s32.totalorder %s24, 1
      %p110 = scmp.ne.s32.totalorder %s105, %s107
      %p111 = scmp.eq.s32.totalorder %s24, 0
      %p112 = por %p110, %p111
      %p113 = scmp.ne.s32.totalorder %s105, %s107
      %p114 = scmp.eq.s32.totalorder %s29, 1
      %p115 = por %p113, %p114
      %p116 = scmp.ne.s32.totalorder %s107, %s108
      %p117 = scmp.eq.s32.totalorder %s29, 0
      %p118 = por %p116, %p117
      %p119 = scmp.ne.s32.totalorder %s107, %s108
      %p120 = scmp.eq.s32.totalorder %s30, 1
      %p121 = por %p119, %p120
      %p123 = scmp.ne.s32.totalorder %s108, %s122
      %p124 = scmp.eq.s32.totalorder %s30, 0
      %p125 = por %p123, %p124
      %s127 = sadd.s32 %s126, 1
      %p130 = scmp.eq.s32.totalorder %s24, 1
      %p131 = scmp.ne.s32.totalorder %s126, %s128
      %p132 = scmp.eq.s32.totalorder %s24, 0
      %p133 = por %p131, %p132
      %p134 = scmp.ne.s32.totalorder %s126, %s128
      %p135 = scmp.eq.s32.totalorder %s29, 1
      %p136 = por %p134, %p135
      %p137 = scmp.ne.s32.totalorder %s128, %s129
      %p138 = scmp.eq.s32.totalorder %s29, 0
      %p139 = por %p137, %p138
      %p140 = scmp.ne.s32.totalorder %s128, %s129
      %p141 = scmp.eq.s32.totalorder %s30, 1
      %p142 = por %p140, %p141
      %p144 = scmp.ne.s32.totalorder %s129, %s143
      %p145 = scmp.eq.s32.totalorder %s30, 0
      %p146 = por %p144, %p145
      %s148 = sadd.s32 %s147, 1
      %p151 = scmp.eq.s32.totalorder %s24, 1
      %p152 = scmp.ne.s32.totalorder %s147, %s149
      %p153 = scmp.eq.s32.totalorder %s24, 0
      %p154 = por %p152, %p153
      %p155 = scmp.ne.s32.totalorder %s147, %s149
      %p156 = scmp.eq.s32.totalorder %s29, 1
      %p157 = por %p155, %p156
      %p158 = scmp.ne.s32.totalorder %s149, %s150
      %p159 = scmp.eq.s32.totalorder %s29, 0
      %p160 = por %p158, %p159
      %p161 = scmp.ne.s32.totalorder %s149, %s150
      %p162 = scmp.eq.s32.totalorder %s30, 1
      %p163 = por %p161, %p162
      %p165 = scmp.ne.s32.totalorder %s150, %s164
      %p166 = scmp.eq.s32.totalorder %s30, 0
      %p167 = por %p165, %p166
      %s169 = sadd.s32 %s168, 1
      %p172 = scmp.eq.s32.totalorder %s24, 1
      %p173 = scmp.ne.s32.totalorder %s168, %s170
      %p174 = scmp.eq.s32.totalorder %s24, 0
      %p175 = por %p173, %p174
      %p176 = scmp.ne.s32.totalorder %s168, %s170
      %p177 = scmp.eq.s32.totalorder %s29, 1
      %p178 = por %p176, %p177
      %p179 = scmp.ne.s32.totalorder %s170, %s171
      %p180 = scmp.eq.s32.totalorder %s29, 0
      %p181 = por %p179, %p180
      %p182 = scmp.ne.s32.totalorder %s170, %s171
      %p183 = scmp.eq.s32.totalorder %s30, 1
      %p184 = por %p182, %p183
      %p186 = scmp.ne.s32.totalorder %s171, %s185
      %p187 = scmp.eq.s32.totalorder %s30, 0
      %p188 = por %p186, %p187
      %s190 = sadd.s32 %s189, 1
      %p193 = scmp.eq.s32.totalorder %s24, 1
      %p194 = scmp.ne.s32.totalorder %s189, %s191
      %p195 = scmp.eq.s32.totalorder %s24, 0
      %p196 = por %p194, %p195
      %p197 = scmp.ne.s32.totalorder %s189, %s191
      %p198 = scmp.eq.s32.totalorder %s29, 1
      %p199 = por %p197, %p198
      %p200 = scmp.ne.s32.totalorder %s191, %s192
      %p201 = scmp.eq.s32.totalorder %s29, 0
      %p202 = por %p200, %p201
      %p203 = scmp.ne.s32.totalorder %s191, %s192
      %p204 = scmp.eq.s32.totalorder %s30, 1
      %p205 = por %p203, %p204
      %p207 = scmp.ne.s32.totalorder %s192, %s206
      %p208 = scmp.eq.s32.totalorder %s30, 0
      %p209 = por %p207, %p208
      %s211 = sadd.s32 %s210, 1
      %p214 = scmp.eq.s32.totalorder %s24, 1
      %p215 = scmp.ne.s32.totalorder %s210, %s212
      %p216 = scmp.eq.s32.totalorder %s24, 0
      %p217 = por %p215, %p216
      %p218 = scmp.ne.s32.totalorder %s210, %s212
      %p219 = scmp.eq.s32.totalorder %s29, 1
      %p220 = por %p218, %p219
      %p221 = scmp.ne.s32.totalorder %s212, %s213
      %p222 = scmp.eq.s32.totalorder %s29, 0
      %p223 = por %p221, %p222
      %p224 = scmp.ne.s32.totalorder %s212, %s213
      %p225 = scmp.eq.s32.totalorder %s30, 1
      %p226 = por %p224, %p225
      %p228 = scmp.ne.s32.totalorder %s213, %s227
      %p229 = scmp.eq.s32.totalorder %s30, 0
      %p230 = por %p228, %p229
      %s232 = sadd.s32 %s231, 1
      %p235 = scmp.eq.s32.totalorder %s24, 1
      %p236 = scmp.ne.s32.totalorder %s231, %s233
      %p237 = scmp.eq.s32.totalorder %s24, 0
      %p238 = por %p236, %p237
      %p239 = scmp.ne.s32.totalorder %s231, %s233
      %p240 = scmp.eq.s32.totalorder %s29, 1
      %p241 = por %p239, %p240
      %p242 = scmp.ne.s32.totalorder %s233, %s234
      %p243 = scmp.eq.s32.totalorder %s29, 0
      %p244 = por %p242, %p243
      %p245 = scmp.ne.s32.totalorder %s233, %s234
      %p246 = scmp.eq.s32.totalorder %s30, 1
      %p247 = por %p245, %p246
      %p249 = scmp.ne.s32.totalorder %s234, %s248
      %p250 = scmp.eq.s32.totalorder %s30, 0
      %p251 = por %p249, %p250
      %s253 = sadd.s32 %s252, 1
      %p256 = scmp.eq.s32.totalorder %s24, 1
      %p257 = scmp.ne.s32.totalorder %s252, %s254
      %p258 = scmp.eq.s32.totalorder %s24, 0
      %p259 = por %p257, %p258
      %p260 = scmp.ne.s32.totalorder %s252, %s254
      %p261 = scmp.eq.s32.totalorder %s29, 1
      %p262 = por %p260, %p261
      %p263 = scmp.ne.s32.totalorder %s254, %s255
      %p264 = scmp.eq.s32.totalorder %s29, 0
      %p265 = por %p263, %p264
      %p266 = scmp.ne.s32.totalorder %s254, %s255
      %p267 = scmp.eq.s32.totalorder %s30, 1
      %p268 = por %p266, %p267
      %p270 = scmp.ne.s32.totalorder %s255, %s269
      %p271 = scmp.eq.s32.totalorder %s30, 0
      %p272 = por %p270, %p271
      %s274 = sadd.s32 %s273, 1
      %p277 = scmp.eq.s32.totalorder %s24, 1
      %p278 = scmp.ne.s32.totalorder %s273, %s275
      %p279 = scmp.eq.s32.totalorder %s24, 0
      %p280 = por %p278, %p279
      %p281 = scmp.ne.s32.totalorder %s273, %s275
      %p282 = scmp.eq.s32.totalorder %s29, 1
      %p283 = por %p281, %p282
      %p284 = scmp.ne.s32.totalorder %s275, %s276
      %p285 = scmp.eq.s32.totalorder %s29, 0
      %p286 = por %p284, %p285
      %p287 = scmp.ne.s32.totalorder %s275, %s276
      %p288 = scmp.eq.s32.totalorder %s30, 1
      %p289 = por %p287, %p288
      %p291 = scmp.ne.s32.totalorder %s276, %s290
      %p292 = scmp.eq.s32.totalorder %s30, 0
      %p293 = por %p291, %p292
      %s295 = sadd.s32 %s294, 1
      %p298 = scmp.eq.s32.totalorder %s24, 1
      %p299 = scmp.ne.s32.totalorder %s294, %s296
      %p300 = scmp.eq.s32.totalorder %s24, 0
      %p301 = por %p299, %p300
      %p302 = scmp.ne.s32.totalorder %s294, %s296
      %p303 = scmp.eq.s32.totalorder %s29, 1
      %p304 = por %p302, %p303
      %p305 = scmp.ne.s32.totalorder %s296, %s297
      %p306 = scmp.eq.s32.totalorder %s29, 0
      %p307 = por %p305, %p306
      %p308 = scmp.ne.s32.totalorder %s296, %s297
      %p309 = scmp.eq.s32.totalorder %s30, 1
      %p310 = por %p308, %p309
      %p312 = scmp.ne.s32.totalorder %s297, %s311
      %p313 = scmp.eq.s32.totalorder %s30, 0
      %p314 = por %p312, %p313
      %s315 = ssub.s32 %s24, %s31
      %p316 = scmp.eq.s32.totalorder %s315, 0
      %s318 = sadd.s32 %s317, 1
      %s319 = scalar_select %p316, %s317, %s318
      %p322 = pneg %p316
      %p323 = scmp.eq.s32.totalorder %s24, 1
      %p324 = por %p322, %p323
      %p325 = scmp.ne.s32.totalorder %s317, %s320
      %p326 = scmp.eq.s32.totalorder %s24, 0
      %p327 = por %p325, %p326
      %p328 = scmp.ne.s32.totalorder %s317, %s320
      %p329 = scmp.eq.s32.totalorder %s29, 1
      %p330 = por %p328, %p329
      %p331 = scmp.ne.s32.totalorder %s320, %s321
      %p332 = scmp.eq.s32.totalorder %s29, 0
      %p333 = por %p331, %p332
      %p334 = scmp.ne.s32.totalorder %s320, %s321
      %p335 = scmp.eq.s32.totalorder %s30, 1
      %p336 = por %p334, %p335
      %p338 = scmp.ne.s32.totalorder %s321, %s337
      %p339 = scmp.eq.s32.totalorder %s30, 0
      %p340 = por %p338, %p339
      %p341 = scmp.le.s32.totalorder 1, %s24
      %p342 = scmp.lt.s32.totalorder %s24, 3
      %p343 = pnand %p341, %p342
      %p344 = pneg %p343
      // Predicated region
      $region9: #{tpu_custom_call.1} parent=5 // pred_check
        _
      $region10: #{tpu_custom_call.1} parent=5 // pred_check_branch
        %346 = sbr.rel (%p343) target = $region12
      $region11: #{tpu_custom_call.1} parent=5 // pred_region
        %s347 = ssub.s32 %s24, 1
        // Predicated region
        $region13: #{tpu_custom_call.1} parent=11 // pred_check
          %p348 = pneg %p97
        $region14: #{tpu_custom_call.1} parent=11 // pred_check_branch
          %350 = sbr.rel (%p348) target = $region16
        $region15: #{tpu_custom_call.1} parent=11 // pred_region
          _
        $region16: #{tpu_custom_call.1} parent=11 // pred_fallthru
          _
        // Predicated region
        $region17: #{tpu_custom_call.1} parent=11 // pred_check
          %p351 = pneg %p118
        $region18: #{tpu_custom_call.1} parent=11 // pred_check_branch
          %353 = sbr.rel (%p351) target = $region20
        $region19: #{tpu_custom_call.1} parent=11 // pred_region
          _
        $region20: #{tpu_custom_call.1} parent=11 // pred_fallthru
          _
        // Predicated region
        $region21: #{tpu_custom_call.1} parent=11 // pred_check
          %p354 = pneg %p139
        $region22: #{tpu_custom_call.1} parent=11 // pred_check_branch
          %356 = sbr.rel (%p354) target = $region24
        $region23: #{tpu_custom_call.1} parent=11 // pred_region
          _
        $region24: #{tpu_custom_call.1} parent=11 // pred_fallthru
          _
        // Predicated region
        $region25: #{tpu_custom_call.1} parent=11 // pred_check
          %p357 = pneg %p160
        $region26: #{tpu_custom_call.1} parent=11 // pred_check_branch
          %359 = sbr.rel (%p357) target = $region28
        $region27: #{tpu_custom_call.1} parent=11 // pred_region
          _
        $region28: #{tpu_custom_call.1} parent=11 // pred_fallthru
          _
        // Predicated region
        $region29: #{tpu_custom_call.1} parent=11 // pred_check
          %p360 = pneg %p181
        $region30: #{tpu_custom_call.1} parent=11 // pred_check_branch
          %362 = sbr.rel (%p360) target = $region32
        $region31: #{tpu_custom_call.1} parent=11 // pred_region
          _
        $region32: #{tpu_custom_call.1} parent=11 // pred_fallthru
          _
        // Predicated region
        $region33: #{tpu_custom_call.1} parent=11 // pred_check
          %p363 = pneg %p202
        $region34: #{tpu_custom_call.1} parent=11 // pred_check_branch
          %365 = sbr.rel (%p363) target = $region36
        $region35: #{tpu_custom_call.1} parent=11 // pred_region
          _
        $region36: #{tpu_custom_call.1} parent=11 // pred_fallthru
          _
        // Predicated region
        $region37: #{tpu_custom_call.1} parent=11 // pred_check
          %p366 = pneg %p223
        $region38: #{tpu_custom_call.1} parent=11 // pred_check_branch
          %368 = sbr.rel (%p366) target = $region40
        $region39: #{tpu_custom_call.1} parent=11 // pred_region
          _
        $region40: #{tpu_custom_call.1} parent=11 // pred_fallthru
          _
        // Predicated region
        $region41: #{tpu_custom_call.1} parent=11 // pred_check
          %p369 = pneg %p244
        $region42: #{tpu_custom_call.1} parent=11 // pred_check_branch
          %371 = sbr.rel (%p369) target = $region44
        $region43: #{tpu_custom_call.1} parent=11 // pred_region
          _
        $region44: #{tpu_custom_call.1} parent=11 // pred_fallthru
          _
        // Predicated region
        $region45: #{tpu_custom_call.1} parent=11 // pred_check
          %p372 = pneg %p265
        $region46: #{tpu_custom_call.1} parent=11 // pred_check_branch
          %374 = sbr.rel (%p372) target = $region48
        $region47: #{tpu_custom_call.1} parent=11 // pred_region
          _
        $region48: #{tpu_custom_call.1} parent=11 // pred_fallthru
          _
        // Predicated region
        $region49: #{tpu_custom_call.1} parent=11 // pred_check
          %p375 = pneg %p286
        $region50: #{tpu_custom_call.1} parent=11 // pred_check_branch
          %377 = sbr.rel (%p375) target = $region52
        $region51: #{tpu_custom_call.1} parent=11 // pred_region
          _
        $region52: #{tpu_custom_call.1} parent=11 // pred_fallthru
          _
        // Predicated region
        $region53: #{tpu_custom_call.1} parent=11 // pred_check
          %p378 = pneg %p307
        $region54: #{tpu_custom_call.1} parent=11 // pred_check_branch
          %380 = sbr.rel (%p378) target = $region56
        $region55: #{tpu_custom_call.1} parent=11 // pred_region
          _
        $region56: #{tpu_custom_call.1} parent=11 // pred_fallthru
          _
      $region12: #{tpu_custom_call.1} parent=5 // pred_fallthru
        _
      %p381 = scmp.lt.s32.totalorder %s24, 2
      // Predicated region
      $region57: #{tpu_custom_call.1} parent=5 // pred_check
        %p382 = pneg %p381
      $region58: #{tpu_custom_call.1} parent=5 // pred_check_branch
        %384 = sbr.rel (%p382) target = $region60
      $region59: #{tpu_custom_call.1} parent=5 // pred_region
        // Predicated region
        $region61: #{tpu_custom_call.1} parent=59 // pred_check
          %p385 = pneg %p44
        $region62: #{tpu_custom_call.1} parent=59 // pred_check_branch
          %387 = sbr.rel (%p385) target = $region64
        $region63: #{tpu_custom_call.1} parent=59 // pred_region
          %p388 = scmp.lt.s32.totalorder %s24, 1
          %s389 = scalar_select %p388, %s24, 1
          %s390 = smul.addr %s389, 4
          %s391 = scalar_lea.vmem %s0, %s390
        $region64: #{tpu_custom_call.1} parent=59 // pred_fallthru
          _
        // Predicated region
        $region65: #{tpu_custom_call.1} parent=59 // pred_check
          %p392 = pneg %p70
        $region66: #{tpu_custom_call.1} parent=59 // pred_check_branch
          %394 = sbr.rel (%p392) target = $region68
        $region67: #{tpu_custom_call.1} parent=59 // pred_region
          %p395 = scmp.lt.s32.totalorder %s24, 1
          %s396 = scalar_select %p395, %s24, 1
          %s397 = smul.addr %s396, 4
          %s398 = scalar_lea.vmem %s1, %s397
        $region68: #{tpu_custom_call.1} parent=59 // pred_fallthru
          _
      $region60: #{tpu_custom_call.1} parent=5 // pred_fallthru
        _
      %p399 = scmp.le.s32.totalorder 1, %s24
      %p400 = scmp.lt.s32.totalorder %s24, 3
      %p401 = pnand %p399, %p400
      %p402 = pneg %p401
      // Predicated region
      $region69: #{tpu_custom_call.1} parent=5 // pred_check
        _
      $region70: #{tpu_custom_call.1} parent=5 // pred_check_branch
        %404 = sbr.rel (%p401) target = $region72
      $region71: #{tpu_custom_call.1} parent=5 // pred_region
        %s405 = ssub.s32 %s24, 1
        %p406 = scmp.lt.s32.totalorder %s29, 1
        %s407 = scalar_select %p406, %s29, 1
        %s408 = smul.addr %s407, 4
        %s409 = scalar_lea.vmem %s0, %s408
        %p410 = pneg %p50
        %p411 = pneg %p47
        %p412 = scmp.lt.s32.totalorder %s29, 1
        %s413 = scalar_select %p412, %s29, 1
        %s414 = smul.addr %s413, 4
        %s415 = scalar_lea.vmem %s1, %s414
        %p416 = pneg %p76
        %p417 = pneg %p73
        %p418 = pneg %p97
        %p419 = pneg %p94
        %p420 = pneg %p118
        %p421 = pneg %p115
        %p422 = pneg %p139
        %p423 = pneg %p136
        %p424 = pneg %p160
        %p425 = pneg %p157
        %p426 = pneg %p181
        %p427 = pneg %p178
        %p428 = pneg %p202
        %p429 = pneg %p199
        %p430 = pneg %p223
        %p431 = pneg %p220
        %p432 = pneg %p244
        %p433 = pneg %p241
        %p434 = pneg %p265
        %p435 = pneg %p262
        %p436 = pneg %p286
        %p437 = pneg %p283
        %p438 = pneg %p307
        %p439 = pneg %p304
        %p440 = pneg %p333
        %p441 = pneg %p330
        %s442 = sand.u32 %s320, 1
        %s443 = scalar_lea.sflag [#allocation4], %s442
        %s444 = sand.u32 %s320, 1
        %s445 = scalar_lea.vmem [#allocation3], %s444
        %p446 = scmp.lt.s32.totalorder %s29, 1
        %s447 = scalar_select %p446, %s29, 1
        %s448 = smul.addr %s447, 4
        %s449 = scalar_lea.vmem %s0, %s448
        %p450 = scmp.lt.s32.totalorder %s29, 1
        %s451 = scalar_select %p450, %s29, 1
        %s452 = smul.addr %s451, 4
        %s453 = scalar_lea.vmem %s1, %s452
        %v455 = vld [vmem:[%s449] sm:$0xf]
        %v456 = vld [vmem:[%s453] sm:$0xf]
        %v457 = vld [vmem:[%s2] sm:$0xf]
        %vm458 = vcmask 64512
        %v460 = vsel %vm458, %v455, 0
        %vm462 = vcmask 1043456
        %v464 = vsel %vm462, %v457, 0
        %466 = vmatprep.subr.bf16.mxu0 0
        %467 = vmatpush1.bf16.msra.mxu0 %v464
        %468 = vmatprep.subr.bf16.mxu0 0
        %469 = vmatpush1.bf16.msra.mxu0 0
        %470 = vmatprep.subr.bf16.mxu0 0
        %471 = vmatpush1.bf16.msra.mxu0 0
        %472 = vmatprep.subr.bf16.mxu0 0
        %473 = vmatpush1.bf16.msra.mxu0 0
        %474 = vmatprep.subr.bf16.mxu0 0
        %475 = vmatpush1.bf16.msra.mxu0 0
        %476 = vmatprep.subr.bf16.mxu0 0
        %477 = vmatpush1.bf16.msra.mxu0 0
        %478 = vmatprep.subr.bf16.mxu0 0
        %479 = vmatpush1.bf16.msra.mxu0 0
        %480 = vmatprep.subr.bf16.mxu0 0
        %481 = vmatpush1.bf16.msra.mxu0 0
        %482 = vmatprep.subr.bf16.mxu0 0
        %483 = vmatpush1.bf16.msra.mxu0 0
        %484 = vmatprep.subr.bf16.mxu0 0
        %485 = vmatpush1.bf16.msra.mxu0 0
        %486 = vmatprep.subr.bf16.mxu0 0
        %487 = vmatpush1.bf16.msra.mxu0 0
        %488 = vmatprep.subr.bf16.mxu0 0
        %489 = vmatpush1.bf16.msra.mxu0 0
        %490 = vmatprep.subr.bf16.mxu0 0
        %491 = vmatpush1.bf16.msra.mxu0 0
        %492 = vmatprep.subr.bf16.mxu0 0
        %493 = vmatpush1.bf16.msra.mxu0 0
        %494 = vmatprep.subr.bf16.mxu0 0
        %495 = vmatpush1.bf16.msra.mxu0 0
        %496 = vmatprep.subr.bf16.mxu0 0
        %497 = vmatpush1.bf16.msra.mxu0 0
        %498 = vmatprep.mubr.bf16.mxu0 0
        %499 = vmatmul.mubr.bf16.gmra.mrb[0].mxu0 %v460
        %v500 = vpop.f32.mrb[0].mxu0
        %v501 = vadd.f32 0.0, %v500
        %v502 = vpop.f32.mrb[0].mxu0
        %v503 = vpop.f32.mrb[0].mxu0
        %v504 = vpop.f32.mrb[0].mxu0
        %505 = vdwg.mxu0
        %v506 = vld [vmem:[%s3] sm:$0xf]
        %v508 = vsel %vm458, %v456, 0
        %v511 = vsel %vm462, %v506, 0
        %513 = vmatprep.subr.bf16.mxu0 0
        %514 = vmatpush1.bf16.msra.mxu0 %v511
        %515 = vmatprep.subr.bf16.mxu0 0
        %516 = vmatpush1.bf16.msra.mxu0 0
        %517 = vmatprep.subr.bf16.mxu0 0
        %518 = vmatpush1.bf16.msra.mxu0 0
        %519 = vmatprep.subr.bf16.mxu0 0
        %520 = vmatpush1.bf16.msra.mxu0 0
        %521 = vmatprep.subr.bf16.mxu0 0
        %522 = vmatpush1.bf16.msra.mxu0 0
        %523 = vmatprep.subr.bf16.mxu0 0
        %524 = vmatpush1.bf16.msra.mxu0 0
        %525 = vmatprep.subr.bf16.mxu0 0
        %526 = vmatpush1.bf16.msra.mxu0 0
        %527 = vmatprep.subr.bf16.mxu0 0
        %528 = vmatpush1.bf16.msra.mxu0 0
        %529 = vmatprep.subr.bf16.mxu0 0
        %530 = vmatpush1.bf16.msra.mxu0 0
        %531 = vmatprep.subr.bf16.mxu0 0
        %532 = vmatpush1.bf16.msra.mxu0 0
        %533 = vmatprep.subr.bf16.mxu0 0
        %534 = vmatpush1.bf16.msra.mxu0 0
        %535 = vmatprep.subr.bf16.mxu0 0
        %536 = vmatpush1.bf16.msra.mxu0 0
        %537 = vmatprep.subr.bf16.mxu0 0
        %538 = vmatpush1.bf16.msra.mxu0 0
        %539 = vmatprep.subr.bf16.mxu0 0
        %540 = vmatpush1.bf16.msra.mxu0 0
        %541 = vmatprep.subr.bf16.mxu0 0
        %542 = vmatpush1.bf16.msra.mxu0 0
        %543 = vmatprep.subr.bf16.mxu0 0
        %544 = vmatpush1.bf16.msra.mxu0 0
        %545 = vmatprep.mubr.bf16.mxu0 0
        %546 = vmatmul.mubr.bf16.gmra.mrb[0].mxu0 %v508
        %v547 = vpop.f32.mrb[0].mxu0
        %v548 = vadd.f32 0.0, %v547
        %v549 = vpop.f32.mrb[0].mxu0
        %v550 = vpop.f32.mrb[0].mxu0
        %v551 = vpop.f32.mrb[0].mxu0
        %552 = vdwg.mxu0
        %v553 = vld [vmem:[%s4] sm:$0xf]
        %v554 = vld [vmem:[%s4 + $0x4] sm:$0xf]
        %v555 = vld [vmem:[%s4 + $0x8] sm:$0xf]
        %v556 = vld [vmem:[%s4 + $0xc] sm:$0xf]
        %v557 = vld [vmem:[%s4 + $0x10] sm:$0xf]
        %v558 = vld [vmem:[%s4 + $0x14] sm:$0xf]
        %v559 = vld [vmem:[%s4 + $0x18] sm:$0xf]
        %v560 = vld [vmem:[%s4 + $0x1c] sm:$0xf]
        %v561 = vpack.c.bf16 %v501, %v501
        %v570 = vunpack.c.l.b16 %v553
        %v571 = vunpack.c.l.b16 %v554
        %v572 = vunpack.c.l.b16 %v555
        %v573 = vunpack.c.l.b16 %v556
        %v574 = vunpack.c.l.b16 %v557
        %v575 = vunpack.c.l.b16 %v558
        %v576 = vunpack.c.l.b16 %v559
        %v577 = vunpack.c.l.b16 %v560
        %v578 = vpack.c.b16 %v571, %v570
        %v579 = vpack.c.b16 %v573, %v572
        %v580 = vpack.c.b16 %v575, %v574
        %v581 = vpack.c.b16 %v577, %v576
        %v583 = vsel %vm458, %v578, 0
        %v586 = vsel %vm458, %v579, 0
        %v589 = vsel %vm458, %v580, 0
        %v592 = vsel %vm458, %v581, 0
        %v595 = vsel %vm462, %v561, 0
        %597 = vmatprep.subr.bf16.mxu0 0
        %598 = vmatpush1.bf16.msra.mxu0 %v595
        %599 = vmatprep.subr.bf16.mxu0 0
        %600 = vmatpush1.bf16.msra.mxu0 0
        %601 = vmatprep.subr.bf16.mxu0 0
        %602 = vmatpush1.bf16.msra.mxu0 0
        %603 = vmatprep.subr.bf16.mxu0 0
        %604 = vmatpush1.bf16.msra.mxu0 0
        %605 = vmatprep.subr.bf16.mxu0 0
        %606 = vmatpush1.bf16.msra.mxu0 0
        %607 = vmatprep.subr.bf16.mxu0 0
        %608 = vmatpush1.bf16.msra.mxu0 0
        %609 = vmatprep.subr.bf16.mxu0 0
        %610 = vmatpush1.bf16.msra.mxu0 0
        %611 = vmatprep.subr.bf16.mxu0 0
        %612 = vmatpush1.bf16.msra.mxu0 0
        %613 = vmatprep.subr.bf16.mxu0 0
        %614 = vmatpush1.bf16.msra.mxu0 0
        %615 = vmatprep.subr.bf16.mxu0 0
        %616 = vmatpush1.bf16.msra.mxu0 0
        %617 = vmatprep.subr.bf16.mxu0 0
        %618 = vmatpush1.bf16.msra.mxu0 0
        %619 = vmatprep.subr.bf16.mxu0 0
        %620 = vmatpush1.bf16.msra.mxu0 0
        %621 = vmatprep.subr.bf16.mxu0 0
        %622 = vmatpush1.bf16.msra.mxu0 0
        %623 = vmatprep.subr.bf16.mxu0 0
        %624 = vmatpush1.bf16.msra.mxu0 0
        %625 = vmatprep.subr.bf16.mxu0 0
        %626 = vmatpush1.bf16.msra.mxu0 0
        %627 = vmatprep.subr.bf16.mxu0 0
        %628 = vmatpush1.bf16.msra.mxu0 0
        %629 = vmatprep.mubr.bf16.mxu0 0
        %630 = vmatmul.mubr.bf16.gmra.mrb[0].mxu0 %v583
        %v631 = vpop.f32.mrb[0].mxu0
        %v632 = vadd.f32 0.0, %v631
        %v633 = vpop.f32.mrb[0].mxu0
        %v634 = vpop.f32.mrb[0].mxu0
        %v635 = vadd.f32 0.0, %v634
        %v636 = vpop.f32.mrb[0].mxu0
        %637 = vmatprep.mubr.bf16.mxu0 0
        %638 = vmatmul.mubr.bf16.gmra.mrb[0].mxu0 %v586
        %v639 = vpop.f32.mrb[0].mxu0
        %v640 = vadd.f32 0.0, %v639
        %v641 = vpop.f32.mrb[0].mxu0
        %v642 = vpop.f32.mrb[0].mxu0
        %v643 = vadd.f32 0.0, %v642
        %v644 = vpop.f32.mrb[0].mxu0
        %645 = vmatprep.mubr.bf16.mxu0 0
        %646 = vmatmul.mubr.bf16.gmra.mrb[0].mxu0 %v589
        %v647 = vpop.f32.mrb[0].mxu0
        %v648 = vadd.f32 0.0, %v647
        %v649 = vpop.f32.mrb[0].mxu0
        %v650 = vpop.f32.mrb[0].mxu0
        %v651 = vadd.f32 0.0, %v650
        %v652 = vpop.f32.mrb[0].mxu0
        %653 = vmatprep.mubr.bf16.mxu0 0
        %654 = vmatmul.mubr.bf16.gmra.mrb[0].mxu0 %v592
        %v655 = vpop.f32.mrb[0].mxu0
        %v656 = vadd.f32 0.0, %v655
        %v657 = vpop.f32.mrb[0].mxu0
        %v658 = vpop.f32.mrb[0].mxu0
        %v659 = vadd.f32 0.0, %v658
        %v660 = vpop.f32.mrb[0].mxu0
        %661 = vdwg.mxu0
        %v662 = vld [vmem:[%s5] sm:$0xf]
        %v663 = vld [vmem:[%s5 + $0x4] sm:$0xf]
        %v664 = vld [vmem:[%s5 + $0x8] sm:$0xf]
        %v665 = vld [vmem:[%s5 + $0xc] sm:$0xf]
        %v666 = vld [vmem:[%s5 + $0x10] sm:$0xf]
        %v667 = vld [vmem:[%s5 + $0x14] sm:$0xf]
        %v668 = vld [vmem:[%s5 + $0x18] sm:$0xf]
        %v669 = vld [vmem:[%s5 + $0x1c] sm:$0xf]
        %v670 = vpack.c.bf16 %v548, %v548
        %v679 = vunpack.c.l.b16 %v662
        %v680 = vunpack.c.l.b16 %v663
        %v681 = vunpack.c.l.b16 %v664
        %v682 = vunpack.c.l.b16 %v665
        %v683 = vunpack.c.l.b16 %v666
        %v684 = vunpack.c.l.b16 %v667
        %v685 = vunpack.c.l.b16 %v668
        %v686 = vunpack.c.l.b16 %v669
        %v687 = vpack.c.b16 %v680, %v679
        %v688 = vpack.c.b16 %v682, %v681
        %v689 = vpack.c.b16 %v684, %v683
        %v690 = vpack.c.b16 %v686, %v685
        %v692 = vsel %vm458, %v687, 0
        %v695 = vsel %vm458, %v688, 0
        %v698 = vsel %vm458, %v689, 0
        %v701 = vsel %vm458, %v690, 0
        %v704 = vsel %vm462, %v670, 0
        %706 = vmatprep.subr.bf16.mxu0 0
        %707 = vmatpush1.bf16.msra.mxu0 %v704
        %708 = vmatprep.subr.bf16.mxu0 0
        %709 = vmatpush1.bf16.msra.mxu0 0
        %710 = vmatprep.subr.bf16.mxu0 0
        %711 = vmatpush1.bf16.msra.mxu0 0
        %712 = vmatprep.subr.bf16.mxu0 0
        %713 = vmatpush1.bf16.msra.mxu0 0
        %714 = vmatprep.subr.bf16.mxu0 0
        %715 = vmatpush1.bf16.msra.mxu0 0
        %716 = vmatprep.subr.bf16.mxu0 0
        %717 = vmatpush1.bf16.msra.mxu0 0
        %718 = vmatprep.subr.bf16.mxu0 0
        %719 = vmatpush1.bf16.msra.mxu0 0
        %720 = vmatprep.subr.bf16.mxu0 0
        %721 = vmatpush1.bf16.msra.mxu0 0
        %722 = vmatprep.subr.bf16.mxu0 0
        %723 = vmatpush1.bf16.msra.mxu0 0
        %724 = vmatprep.subr.bf16.mxu0 0
        %725 = vmatpush1.bf16.msra.mxu0 0
        %726 = vmatprep.subr.bf16.mxu0 0
        %727 = vmatpush1.bf16.msra.mxu0 0
        %728 = vmatprep.subr.bf16.mxu0 0
        %729 = vmatpush1.bf16.msra.mxu0 0
        %730 = vmatprep.subr.bf16.mxu0 0
        %731 = vmatpush1.bf16.msra.mxu0 0
        %732 = vmatprep.subr.bf16.mxu0 0
        %733 = vmatpush1.bf16.msra.mxu0 0
        %734 = vmatprep.subr.bf16.mxu0 0
        %735 = vmatpush1.bf16.msra.mxu0 0
        %736 = vmatprep.subr.bf16.mxu0 0
        %737 = vmatpush1.bf16.msra.mxu0 0
        %738 = vmatprep.mubr.bf16.mxu0 0
        %739 = vmatmul.mubr.bf16.gmra.mrb[0].mxu0 %v692
        %v740 = vpop.f32.mrb[0].mxu0
        %v741 = vadd.f32 0.0, %v740
        %v742 = vpop.f32.mrb[0].mxu0
        %v743 = vpop.f32.mrb[0].mxu0
        %v744 = vadd.f32 0.0, %v743
        %v745 = vpop.f32.mrb[0].mxu0
        %746 = vmatprep.mubr.bf16.mxu0 0
        %747 = vmatmul.mubr.bf16.gmra.mrb[0].mxu0 %v695
        %v748 = vpop.f32.mrb[0].mxu0
        %v749 = vadd.f32 0.0, %v748
        %v750 = vpop.f32.mrb[0].mxu0
        %v751 = vpop.f32.mrb[0].mxu0
        %v752 = vadd.f32 0.0, %v751
        %v753 = vpop.f32.mrb[0].mxu0
        %754 = vmatprep.mubr.bf16.mxu0 0
        %755 = vmatmul.mubr.bf16.gmra.mrb[0].mxu0 %v698
        %v756 = vpop.f32.mrb[0].mxu0
        %v757 = vadd.f32 0.0, %v756
        %v758 = vpop.f32.mrb[0].mxu0
        %v759 = vpop.f32.mrb[0].mxu0
        %v760 = vadd.f32 0.0, %v759
        %v761 = vpop.f32.mrb[0].mxu0
        %762 = vmatprep.mubr.bf16.mxu0 0
        %763 = vmatmul.mubr.bf16.gmra.mrb[0].mxu0 %v701
        %v764 = vpop.f32.mrb[0].mxu0
        %v765 = vadd.f32 0.0, %v764
        %v766 = vpop.f32.mrb[0].mxu0
        %v767 = vpop.f32.mrb[0].mxu0
        %v768 = vadd.f32 0.0, %v767
        %v769 = vpop.f32.mrb[0].mxu0
        %770 = vdwg.mxu0
        %v771 = vmul.f32 %v632, %v741
        %v772 = vmul.f32 %v635, %v744
        %v773 = vmul.f32 %v640, %v749
        %v774 = vmul.f32 %v643, %v752
        %v775 = vmul.f32 %v648, %v757
        %v776 = vmul.f32 %v651, %v760
        %v777 = vmul.f32 %v656, %v765
        %v778 = vmul.f32 %v659, %v768
        %v779 = vpack.c.bf16 %v772, %v771
        %v780 = vpack.c.bf16 %v774, %v773
        %v781 = vpack.c.bf16 %v776, %v775
        %v782 = vpack.c.bf16 %v778, %v777
        %v783 = vld [vmem:[%s6] sm:$0xf]
        %vm784 = vcmask 523264
        %v786 = vsel %vm784, %v783, 0
        %788 = vmatprep.subr.bf16.mxu0 0
        %789 = vmatpush1.bf16.msra.mxu0 %v779
        %790 = vmatprep.subr.bf16.mxu0 0
        %791 = vmatpush1.bf16.msra.mxu0 %v780
        %792 = vmatprep.subr.bf16.mxu0 0
        %793 = vmatpush1.bf16.msra.mxu0 %v781
        %794 = vmatprep.subr.bf16.mxu0 0
        %795 = vmatpush1.bf16.msra.mxu0 %v782
        %796 = vmatprep.subr.bf16.mxu0 0
        %797 = vmatpush1.bf16.msra.mxu0 0
        %798 = vmatprep.subr.bf16.mxu0 0
        %799 = vmatpush1.bf16.msra.mxu0 0
        %800 = vmatprep.subr.bf16.mxu0 0
        %801 = vmatpush1.bf16.msra.mxu0 0
        %802 = vmatprep.subr.bf16.mxu0 0
        %803 = vmatpush1.bf16.msra.mxu0 0
        %804 = vmatprep.subr.bf16.mxu0 0
        %805 = vmatpush1.bf16.msra.mxu0 0
        %806 = vmatprep.subr.bf16.mxu0 0
        %807 = vmatpush1.bf16.msra.mxu0 0
        %808 = vmatprep.subr.bf16.mxu0 0
        %809 = vmatpush1.bf16.msra.mxu0 0
        %810 = vmatprep.subr.bf16.mxu0 0
        %811 = vmatpush1.bf16.msra.mxu0 0
        %812 = vmatprep.subr.bf16.mxu0 0
        %813 = vmatpush1.bf16.msra.mxu0 0
        %814 = vmatprep.subr.bf16.mxu0 0
        %815 = vmatpush1.bf16.msra.mxu0 0
        %816 = vmatprep.subr.bf16.mxu0 0
        %817 = vmatpush1.bf16.msra.mxu0 0
        %818 = vmatprep.subr.bf16.mxu0 0
        %819 = vmatpush1.bf16.msra.mxu0 0
        %820 = vmatprep.mubr.bf16.mxu0 0
        %821 = vmatmul.mubr.bf16.gmra.mrb[0].mxu0 %v786
        %v822 = vpop.f32.mrb[0].mxu0
        %v823 = vadd.f32 0.0, %v822
        %v824 = vpop.f32.mrb[0].mxu0
        %v825 = vpop.f32.mrb[0].mxu0
        %v826 = vpop.f32.mrb[0].mxu0
        %827 = vdwg.mxu0
        %v828 = vld [vmem:[%s7] sm:$0xf]
        %v829 = vld [vmem:[%s7 + $0x4] sm:$0xf]
        %v830 = vld [vmem:[%s7 + $0x8] sm:$0xf]
        %v831 = vld [vmem:[%s7 + $0xc] sm:$0xf]
        %v832 = vpack.c.bf16 %v823, %v823
        %v833 = vld [vmem:[%s8] sm:$0xff]
        %v834 = vld [vmem:[%s8 + $0x8] sm:$0xff]
        %v835 = vld [vmem:[%s8 + $0x10] sm:$0xff]
        %v836 = vld [vmem:[%s8 + $0x18] sm:$0xff]
        %838 = vset.pattern.permute.xlu0 0
        %839 = vperm.xlu0 %838, %v833
        %v840 = vpop.permute.xlu0 %839
        %843 = vset.pattern.permute.xlu0 0
        %844 = vperm.xlu0 %843, %v834
        %v845 = vpop.permute.xlu0 %844
        %848 = vset.pattern.permute.xlu0 0
        %849 = vperm.xlu0 %848, %v835
        %v850 = vpop.permute.xlu0 %849
        %853 = vset.pattern.permute.xlu0 0
        %854 = vperm.xlu0 %853, %v836
        %v855 = vpop.permute.xlu0 %854
        %v861 = vunpack.c.l.b16 %v828
        %v862 = vunpack.c.l.b16 %v829
        %v863 = vunpack.c.l.b16 %v830
        %v864 = vunpack.c.l.b16 %v831
        %v865 = vpack.c.b16 %v862, %v861
        %v866 = vpack.c.b16 %v864, %v863
        %v868 = vsel %vm458, %v865, 0
        %v871 = vsel %vm458, %v866, 0
        %v874 = vsel %vm462, %v832, 0
        %876 = vmatprep.subr.bf16.mxu0 0
        %877 = vmatpush1.bf16.msra.mxu0 %v874
        %878 = vmatprep.subr.bf16.mxu0 0
        %879 = vmatpush1.bf16.msra.mxu0 0
        %880 = vmatprep.subr.bf16.mxu0 0
        %881 = vmatpush1.bf16.msra.mxu0 0
        %882 = vmatprep.subr.bf16.mxu0 0
        %883 = vmatpush1.bf16.msra.mxu0 0
        %884 = vmatprep.subr.bf16.mxu0 0
        %885 = vmatpush1.bf16.msra.mxu0 0
        %886 = vmatprep.subr.bf16.mxu0 0
        %887 = vmatpush1.bf16.msra.mxu0 0
        %888 = vmatprep.subr.bf16.mxu0 0
        %889 = vmatpush1.bf16.msra.mxu0 0
        %890 = vmatprep.subr.bf16.mxu0 0
        %891 = vmatpush1.bf16.msra.mxu0 0
        %892 = vmatprep.subr.bf16.mxu0 0
        %893 = vmatpush1.bf16.msra.mxu0 0
        %894 = vmatprep.subr.bf16.mxu0 0
        %895 = vmatpush1.bf16.msra.mxu0 0
        %896 = vmatprep.subr.bf16.mxu0 0
        %897 = vmatpush1.bf16.msra.mxu0 0
        %898 = vmatprep.subr.bf16.mxu0 0
        %899 = vmatpush1.bf16.msra.mxu0 0
        %900 = vmatprep.subr.bf16.mxu0 0
        %901 = vmatpush1.bf16.msra.mxu0 0
        %902 = vmatprep.subr.bf16.mxu0 0
        %903 = vmatpush1.bf16.msra.mxu0 0
        %904 = vmatprep.subr.bf16.mxu0 0
        %905 = vmatpush1.bf16.msra.mxu0 0
        %906 = vmatprep.subr.bf16.mxu0 0
        %907 = vmatpush1.bf16.msra.mxu0 0
        %908 = vmatprep.mubr.bf16.mxu0 0
        %909 = vmatmul.mubr.bf16.gmra.mrb[0].mxu0 %v868
        %v910 = vpop.f32.mrb[0].mxu0
        %v911 = vadd.f32 %v840, %v910
        %v912 = vpop.f32.mrb[0].mxu0
        %v913 = vpop.f32.mrb[0].mxu0
        %v914 = vadd.f32 %v845, %v913
        %v915 = vpop.f32.mrb[0].mxu0
        %916 = vmatprep.mubr.bf16.mxu0 0
        %917 = vmatmul.mubr.bf16.gmra.mrb[0].mxu0 %v871
        %v918 = vpop.f32.mrb[0].mxu0
        %v919 = vadd.f32 %v850, %v918
        %v920 = vpop.f32.mrb[0].mxu0
        %v921 = vpop.f32.mrb[0].mxu0
        %v922 = vadd.f32 %v855, %v921
        %v923 = vpop.f32.mrb[0].mxu0
        %924 = vdwg.mxu0
        %v925 = vmax.f32 %v911, 0.0
        %v926 = vmax.f32 %v914, 0.0
        %v927 = vmax.f32 %v919, 0.0
        %v928 = vmax.f32 %v922, 0.0
        %v929 = vld [vmem:[%s9] sm:$0xf]
        %v930 = vld [vmem:[%s9 + $0x4] sm:$0xf]
        %v931 = vld [vmem:[%s9 + $0x8] sm:$0xf]
        %v932 = vld [vmem:[%s9 + $0xc] sm:$0xf]
        %v933 = vpack.c.bf16 %v926, %v925
        %v934 = vpack.c.bf16 %v928, %v927
        %v935 = vld [vmem:[%s10] sm:$0xff]
        %v936 = vld [vmem:[%s10 + $0x8] sm:$0xff]
        %v937 = vld [vmem:[%s10 + $0x10] sm:$0xff]
        %v938 = vld [vmem:[%s10 + $0x18] sm:$0xff]
        %940 = vset.pattern.permute.xlu0 0
        %941 = vperm.xlu0 %940, %v935
        %v942 = vpop.permute.xlu0 %941
        %945 = vset.pattern.permute.xlu0 0
        %946 = vperm.xlu0 %945, %v936
        %v947 = vpop.permute.xlu0 %946
        %950 = vset.pattern.permute.xlu0 0
        %951 = vperm.xlu0 %950, %v937
        %v952 = vpop.permute.xlu0 %951
        %955 = vset.pattern.permute.xlu0 0
        %956 = vperm.xlu0 %955, %v938
        %v957 = vpop.permute.xlu0 %956
        %v963 = vunpack.c.l.b16 %v929
        %v964 = vunpack.c.l.b16 %v930
        %v965 = vunpack.c.l.b16 %v931
        %v966 = vunpack.c.l.b16 %v932
        %v967 = vpack.c.b16 %v964, %v963
        %v968 = vpack.c.b16 %v966, %v965
        %vm969 = vcmask 261120
        %v971 = vsel %vm969, %v967, 0
        %v974 = vsel %vm969, %v968, 0
        %976 = vmatprep.subr.bf16.mxu0 0
        %977 = vmatpush1.bf16.msra.mxu0 %v933
        %978 = vmatprep.subr.bf16.mxu0 0
        %979 = vmatpush1.bf16.msra.mxu0 %v934
        %980 = vmatprep.subr.bf16.mxu0 0
        %981 = vmatpush1.bf16.msra.mxu0 0
        %982 = vmatprep.subr.bf16.mxu0 0
        %983 = vmatpush1.bf16.msra.mxu0 0
        %984 = vmatprep.subr.bf16.mxu0 0
        %985 = vmatpush1.bf16.msra.mxu0 0
        %986 = vmatprep.subr.bf16.mxu0 0
        %987 = vmatpush1.bf16.msra.mxu0 0
        %988 = vmatprep.subr.bf16.mxu0 0
        %989 = vmatpush1.bf16.msra.mxu0 0
        %990 = vmatprep.subr.bf16.mxu0 0
        %991 = vmatpush1.bf16.msra.mxu0 0
        %992 = vmatprep.subr.bf16.mxu0 0
        %993 = vmatpush1.bf16.msra.mxu0 0
        %994 = vmatprep.subr.bf16.mxu0 0
        %995 = vmatpush1.bf16.msra.mxu0 0
        %996 = vmatprep.subr.bf16.mxu0 0
        %997 = vmatpush1.bf16.msra.mxu0 0
        %998 = vmatprep.subr.bf16.mxu0 0
        %999 = vmatpush1.bf16.msra.mxu0 0
        %1000 = vmatprep.subr.bf16.mxu0 0
        %1001 = vmatpush1.bf16.msra.mxu0 0
        %1002 = vmatprep.subr.bf16.mxu0 0
        %1003 = vmatpush1.bf16.msra.mxu0 0
        %1004 = vmatprep.subr.bf16.mxu0 0
        %1005 = vmatpush1.bf16.msra.mxu0 0
        %1006 = vmatprep.subr.bf16.mxu0 0
        %1007 = vmatpush1.bf16.msra.mxu0 0
        %1008 = vmatprep.mubr.bf16.mxu0 0
        %1009 = vmatmul.mubr.bf16.gmra.mrb[0].mxu0 %v971
        %v1010 = vpop.f32.mrb[0].mxu0
        %v1011 = vadd.f32 %v942, %v1010
        %v1012 = vpop.f32.mrb[0].mxu0
        %v1013 = vpop.f32.mrb[0].mxu0
        %v1014 = vadd.f32 %v947, %v1013
        %v1015 = vpop.f32.mrb[0].mxu0
        %1016 = vmatprep.mubr.bf16.mxu0 0
        %1017 = vmatmul.mubr.bf16.gmra.mrb[0].mxu0 %v974
        %v1018 = vpop.f32.mrb[0].mxu0
        %v1019 = vadd.f32 %v952, %v1018
        %v1020 = vpop.f32.mrb[0].mxu0
        %v1021 = vpop.f32.mrb[0].mxu0
        %v1022 = vadd.f32 %v957, %v1021
        %v1023 = vpop.f32.mrb[0].mxu0
        %1024 = vdwg.mxu0
        %v1025 = vmax.f32 %v1011, 0.0
        %v1026 = vmax.f32 %v1014, 0.0
        %v1027 = vmax.f32 %v1019, 0.0
        %v1028 = vmax.f32 %v1022, 0.0
        %v1029 = vld [vmem:[%s11] sm:$0x1]
        %v1030 = vpack.c.bf16 %v1026, %v1025
        %v1031 = vpack.c.bf16 %v1028, %v1027
        %v1032 = vld [vmem:[#allocation2] sm:$0x1]
        %1034 = vset.pattern.permute.xlu0 0
        %1035 = vperm.xlu0 %1034, %v1032
        %v1036 = vpop.permute.xlu0 %1035
        %v1038 = vlaneseq
        %v1039 = vshrl.u32 %v1038, 7
        %v1040 = vsub.s32 0, %v1039
        %v1041 = vrot.slane %v1036, %v1040
        %v1043 = vsel %vm969, %v1029, 0
        %1045 = vmatprep.subr.bf16.mxu0 0
        %1046 = vmatpush1.bf16.msra.mxu0 %v1030
        %1047 = vmatprep.subr.bf16.mxu0 0
        %1048 = vmatpush1.bf16.msra.mxu0 %v1031
        %1049 = vmatprep.subr.bf16.mxu0 0
        %1050 = vmatpush1.bf16.msra.mxu0 0
        %1051 = vmatprep.subr.bf16.mxu0 0
        %1052 = vmatpush1.bf16.msra.mxu0 0
        %1053 = vmatprep.subr.bf16.mxu0 0
        %1054 = vmatpush1.bf16.msra.mxu0 0
        %1055 = vmatprep.subr.bf16.mxu0 0
        %1056 = vmatpush1.bf16.msra.mxu0 0
        %1057 = vmatprep.subr.bf16.mxu0 0
        %1058 = vmatpush1.bf16.msra.mxu0 0
        %1059 = vmatprep.subr.bf16.mxu0 0
        %1060 = vmatpush1.bf16.msra.mxu0 0
        %1061 = vmatprep.subr.bf16.mxu0 0
        %1062 = vmatpush1.bf16.msra.mxu0 0
        %1063 = vmatprep.subr.bf16.mxu0 0
        %1064 = vmatpush1.bf16.msra.mxu0 0
        %1065 = vmatprep.subr.bf16.mxu0 0
        %1066 = vmatpush1.bf16.msra.mxu0 0
        %1067 = vmatprep.subr.bf16.mxu0 0
        %1068 = vmatpush1.bf16.msra.mxu0 0
        %1069 = vmatprep.subr.bf16.mxu0 0
        %1070 = vmatpush1.bf16.msra.mxu0 0
        %1071 = vmatprep.subr.bf16.mxu0 0
        %1072 = vmatpush1.bf16.msra.mxu0 0
        %1073 = vmatprep.subr.bf16.mxu0 0
        %1074 = vmatpush1.bf16.msra.mxu0 0
        %1075 = vmatprep.subr.bf16.mxu0 0
        %1076 = vmatpush1.bf16.msra.mxu0 0
        %1077 = vmatprep.mubr.bf16.mxu0 0
        %1078 = vmatmul.mubr.bf16.gmra.mrb[0].mxu0 %v1043
        %v1079 = vpop.f32.mrb[0].mxu0
        %v1080 = vadd.f32 %v1041, %v1079
        %v1081 = vpop.f32.mrb[0].mxu0
        %v1082 = vpop.f32.mrb[0].mxu0
        %v1083 = vpop.f32.mrb[0].mxu0
        %1084 = vdwg.mxu0
        %vm1085 = vcmask 516096
        %1086 = vst.msk [vmem:[%s445] sm:$0x1] %vm1085, %v1080
        %s1087 = sand.u32 %s320, 1
        %s1088 = scalar_lea.sflag [#allocation4], %s1087
        %s1089 = sand.u32 %s320, 1
        %s1090 = scalar_lea.vmem [#allocation3], %s1089
        // Predicated region
        $region73: #{tpu_custom_call.1} parent=71 // pred_check
          %p1091 = pneg %p330
        $region74: #{tpu_custom_call.1} parent=71 // pred_check_branch
          %1093 = sbr.rel (%p1091) target = $region76
        $region75: #{tpu_custom_call.1} parent=71 // pred_region
          %s1095 = ssub.s32 16, 16
          %1096 = vsyncadd %s1088, %s1095
          %s1097 = smul.addr %s29, 16
          %s1098 = scalar_lea.hbm %s13, %s1097
          %s1100 = sshll.u32 %s1090, 4
          %s1101 = int_to_ptr.vmem [resolvable:$true] %s1100
          %1103 = dma.vmem_to_hbm [thread:$0]  %s1101, 16, %s1098, %s1088
        $region76: #{tpu_custom_call.1} parent=71 // pred_fallthru
          _
      $region72: #{tpu_custom_call.1} parent=5 // pred_fallthru
        _
      %p1104 = scmp.le.s32.totalorder 2, %s24
      // Predicated region
      $region77: #{tpu_custom_call.1} parent=5 // pred_check
        %p1105 = pneg %p1104
      $region78: #{tpu_custom_call.1} parent=5 // pred_check_branch
        %1107 = sbr.rel (%p1105) target = $region80
      $region79: #{tpu_custom_call.1} parent=5 // pred_region
        %s1108 = ssub.s32 %s24, 2
        // Predicated region
        $region81: #{tpu_custom_call.1} parent=79 // pred_check
          %p1109 = pneg %p336
        $region82: #{tpu_custom_call.1} parent=79 // pred_check_branch
          %1111 = sbr.rel (%p1109) target = $region84
        $region83: #{tpu_custom_call.1} parent=79 // pred_region
          %s1112 = sand.u32 %s321, 1
          %s1113 = scalar_lea.sflag [#allocation4], %s1112
          %s1114 = sand.u32 %s321, 1
          %s1115 = scalar_lea.vmem [#allocation3], %s1114
          %1116 = dma.done %s1113, 16
        $region84: #{tpu_custom_call.1} parent=79 // pred_fallthru
          _
      $region80: #{tpu_custom_call.1} parent=5 // pred_fallthru
        _
    $region6: #{tpu_custom_call.1} parent=1 // loop_footer
      %s28 = sadd.s32 1, %s24
    $region7: #{tpu_custom_call.1} parent=1 // loop_footer_branch
      %23 = sbr.rel target = $region3
    $region8: #{tpu_custom_call.1} parent=1 // loop_exit
      _
    %1117 = vsyncpa [#allocation4], 1
    %s1118 = scalar_lea.sflag [#allocation4], 1
    %1119 = vsyncpa %s1118, 1

</llo_original>
